<compile_context>
chip_gen: v7x
topology: tpu7x:2x2x1
jax: 0.10.0
libtpu: 0.0.40
codegen_flags: <defaults>
</compile_context>

<pallas_src>
import jax
import jax.numpy as jnp
from jax.experimental import pallas as pl
from jax.experimental.pallas import tpu as pltpu

N_GROUPS = 8
LANE = 128


def _vmem_capacity_bytes():
    try:
        return int(pltpu.get_tpu_info().vmem_capacity_bytes)
    except Exception:
        return 64 * 1024 * 1024   # conservative fallback (v7x physical VMEM)


def _block_spec(shape, index_map, buffers=2):
    """BlockSpec with optional deeper pipelining (falls back if unsupported)."""
    if buffers > 2:
        try:
            return pl.BlockSpec(shape, index_map, pipeline_mode=pl.Buffered(buffers))
        except Exception:
            pass
    return pl.BlockSpec(shape, index_map)


def _pick_batch_tile(b):
    # The y / output blocks carry the batch tile on the sublane axis, so it must
    # be a multiple of 8 or the full batch.  Prefer 8 so that B >= 16 yields
    # >= 2 "parallel" grid blocks (keeps both v7x TensorCores busy).
    return 8 if b % 8 == 0 else b


def _pick_spatial_tile(hwp, bt, c, oc, itemsize, budget):
    # Largest lane-dense spatial tile (multiple of 128 dividing HWp) whose
    # working set (3 x-buffers + 2 out-buffers + pool accumulator) fits budget.
    for cand in (2048, 1024, 512, 256, 128):
        if hwp % cand:
            continue
        need = (3 * bt * c * cand * itemsize
                + 2 * bt * oc * cand * itemsize
                + bt * c * LANE * 4)
        if need <= budget:
            return cand
    return 128


# --------------------------- fused single-pass path ---------------------------
def _fused_call(x_flat, w1, w2, *, bt, oc, hw, hwp, vmem_limit):
    B, C, _ = x_flat.shape
    hid = w1.shape[1]
    nbt = B // bt
    n_chunks = hwp // LANE
    inv_hw = 1.0 / float(hw)
    itemsize = jnp.dtype(x_flat.dtype).itemsize
    w_itemsize = jnp.dtype(w1.dtype).itemsize

    def kernel(x_ref, w1_ref, w2_ref, y_ref, o_ref, acc_ref):
        # ---- global average pool: chunked, pure-VPU accumulation ----
        acc_ref[...] = jnp.zeros_like(acc_ref)

        @pl.loop(0, n_chunks)
        def _(k):
            off = pl.multiple_of(k * LANE, LANE)
            acc_ref[...] += x_ref[:, :, pl.ds(off, LANE)].astype(jnp.float32)

        pooled = acc_ref[...].sum(axis=-1) * inv_hw                    # [bt, C]

        # ---- gate MLP (tiny MXU matmuls) ----
        h = jnp.maximum(
            jnp.dot(pooled, w1_ref[...], preferred_element_type=jnp.float32), 0.0)
        y = jax.nn.sigmoid(
            jnp.dot(h, w2_ref[...], preferred_element_type=jnp.float32))
        y_ref[...] = y

        # Hoist the per-group gate broadcasts out of the spatial loop.
        y3 = y[:, :, None]                                             # [bt, C, 1]
        y_groups = [y3[:, i * oc:(i + 1) * oc, :] for i in range(N_GROUPS)]

        # ---- scale by the gate + sum the 8 channel groups ----
        @pl.loop(0, n_chunks)
        def _(k):
            off = pl.multiple_of(k * LANE, LANE)
            sp = pl.ds(off, LANE)
            acc = x_ref[:, 0:oc, sp].astype(jnp.float32) * y_groups[0]
            for i in range(1, N_GROUPS):
                sl = slice(i * oc, (i + 1) * oc)
                acc = acc + x_ref[:, sl, sp].astype(jnp.float32) * y_groups[i]
            o_ref[:, :, sp] = acc.astype(o_ref.dtype)

    cost = pl.CostEstimate(
        flops=int(3 * B * C * hwp + 4 * B * C * hid),
        transcendentals=int(B * C),
        bytes_accessed=int(x_flat.size * itemsize
                           + (w1.size + w2.size) * w_itemsize
                           + B * C * 4 + B * oc * hwp * itemsize),
    )
    y, out = pl.pallas_call(
        kernel,
        out_shape=(jax.ShapeDtypeStruct((B, C), jnp.float32),
                   jax.ShapeDtypeStruct((B, oc, hwp), x_flat.dtype)),
        grid_spec=pltpu.PrefetchScalarGridSpec(
            num_scalar_prefetch=0,
            grid=(nbt,),
            in_specs=[
                pl.BlockSpec((bt, C, hwp), lambda b: (b, 0, 0)),
                pl.BlockSpec((C, hid), lambda b: (0, 0)),
                pl.BlockSpec((hid, C), lambda b: (0, 0)),
            ],
            out_specs=(
                pl.BlockSpec((bt, C), lambda b: (b, 0)),
                pl.BlockSpec((bt, oc, hwp), lambda b: (b, 0, 0)),
            ),
            scratch_shapes=[pltpu.VMEM((bt, C, LANE), jnp.float32)]),
        compiler_params=pltpu.CompilerParams(
            dimension_semantics=("parallel",),
            vmem_limit_bytes=vmem_limit),
        cost_estimate=cost,
    )(x_flat, w1, w2)
    return y, out


# ------------------------------ two-pass fallback -----------------------------
def _two_pass_call(x_flat, w1, w2, *, bt, oc, hw, hwp, st, vmem_limit):
    B, C, _ = x_flat.shape
    hid = w1.shape[1]
    nbt, nst = B // bt, hwp // st
    n_chunks = st // LANE
    inv_hw = 1.0 / float(hw)
    itemsize = jnp.dtype(x_flat.dtype).itemsize
    w_itemsize = jnp.dtype(w1.dtype).itemsize

    x_tile_bytes = bt * C * st * itemsize
    x_buffers = 3 if x_tile_bytes <= (2 << 20) else 2

    # -------- pass 1: global average pool + gate MLP --------
    def pool_gate_kernel(x_ref, w1_ref, w2_ref, y_ref, acc_ref):
        s = pl.program_id(1)

        @pl.when(s == 0)
        def _init():
            acc_ref[...] = jnp.zeros_like(acc_ref)

        for k in range(n_chunks):        # ref-sliced, pure-VPU accumulation
            acc_ref[...] += x_ref[:, :, k * LANE:(k + 1) * LANE].astype(jnp.float32)

        @pl.when(s == nst - 1)
        def _epilogue():
            pooled = acc_ref[...].sum(axis=-1) * inv_hw                # [bt, C]
            h = jnp.maximum(
                jnp.dot(pooled, w1_ref[...],
                        preferred_element_type=jnp.float32), 0.0)
            y_ref[...] = jax.nn.sigmoid(
                jnp.dot(h, w2_ref[...], preferred_element_type=jnp.float32))

    pool_cost = pl.CostEstimate(
        flops=int(B * C * hwp + 4 * B * C * hid),
        transcendentals=int(B * C),
        bytes_accessed=int(x_flat.size * itemsize
                           + (w1.size + w2.size) * w_itemsize + B * C * 4),
    )
    y = pl.pallas_call(
        pool_gate_kernel,
        out_shape=jax.ShapeDtypeStruct((B, C), jnp.float32),
        grid_spec=pltpu.PrefetchScalarGridSpec(
            num_scalar_prefetch=0,
            grid=(nbt, nst),
            in_specs=[
                _block_spec((bt, C, st), lambda b, s: (b, 0, s), x_buffers),
                pl.BlockSpec((C, hid), lambda b, s: (0, 0)),
                pl.BlockSpec((hid, C), lambda b, s: (0, 0)),
            ],
            out_specs=pl.BlockSpec((bt, C), lambda b, s: (b, 0)),
            scratch_shapes=[pltpu.VMEM((bt, C, LANE), jnp.float32)]),
        compiler_params=pltpu.CompilerParams(
            dimension_semantics=("parallel", "arbitrary"),
            vmem_limit_bytes=vmem_limit),
        cost_estimate=pool_cost,
    )(x_flat, w1, w2)

    # -------- pass 2: scale by gate + sum the 8 channel groups --------
    y3 = y.reshape(B, C, 1)   # keep C on the sublane axis inside the kernel

    def scale_group_sum_kernel(x_ref, y_ref, o_ref):
        yt = y_ref[...]                                                # [bt, C, 1]
        acc = x_ref[:, 0:oc, :].astype(jnp.float32) * yt[:, 0:oc, :]
        for i in range(1, N_GROUPS):
            sl = slice(i * oc, (i + 1) * oc)
            acc = acc + x_ref[:, sl, :].astype(jnp.float32) * yt[:, sl, :]
        o_ref[...] = acc.astype(o_ref.dtype)

    scale_cost = pl.CostEstimate(
        flops=int(2 * B * C * hwp),
        transcendentals=0,
        bytes_accessed=int(x_flat.size * itemsize + B * C * 4
                           + B * oc * hwp * itemsize),
    )
    out = pl.pallas_call(
        scale_group_sum_kernel,
        out_shape=jax.ShapeDtypeStruct((B, oc, hwp), x_flat.dtype),
        grid_spec=pltpu.PrefetchScalarGridSpec(
            num_scalar_prefetch=0,
            grid=(nbt, nst),
            in_specs=[
                _block_spec((bt, C, st), lambda b, s: (b, 0, s), x_buffers),
                pl.BlockSpec((bt, C, 1), lambda b, s: (b, 0, 0)),
            ],
            out_specs=pl.BlockSpec((bt, oc, st), lambda b, s: (b, 0, s))),
        compiler_params=pltpu.CompilerParams(
            dimension_semantics=("parallel", "parallel"),
            vmem_limit_bytes=vmem_limit),
        cost_estimate=scale_cost,
    )(x_flat, y3)
    return y, out


# ----------------------------------- wrapper ----------------------------------
def ops_attention(x, w1, w2, *, force_two_pass=False):
    """x: [B, C, H, W] (NCHW). w1: [C, C//ratio], w2: [C//ratio, C] ([in, out]).

    Returns (output [B, C//8, H, W], op_attention f32[8])."""
    B, C, H, W = x.shape
    assert C % N_GROUPS == 0, "channel must be divisible by 8"
    oc = C // N_GROUPS
    hw = H * W
    hwp = ((hw + LANE - 1) // LANE) * LANE
    itemsize = jnp.dtype(x.dtype).itemsize

    x_flat = x.reshape(B, C, hw)                       # glue reshape (plain JAX)
    if hwp != hw:
        # Zero-pad the flattened spatial axis to a lane multiple; exact because
        # the pool divides by the true H*W and the pad is sliced off the output.
        x_flat = jnp.pad(x_flat, ((0, 0), (0, 0), (0, hwp - hw)))

    bt = _pick_batch_tile(B)
    cap = _vmem_capacity_bytes()
    vmem_limit = int(cap * 0.75)

    # Fused-path working set: x slab + out slab (double-buffered) + y + pool
    # accumulator + weights.
    fused_need = (2 * bt * C * hwp * itemsize
                  + 2 * bt * oc * hwp * itemsize
                  + 2 * bt * C * 4
                  + bt * C * LANE * 4
                  + 2 * (w1.size + w2.size) * jnp.dtype(w1.dtype).itemsize)

    if (not force_two_pass) and fused_need <= vmem_limit - (4 << 20):
        y, out_flat = _fused_call(x_flat, w1, w2, bt=bt, oc=oc, hw=hw, hwp=hwp,
                                  vmem_limit=vmem_limit)
    else:
        st = _pick_spatial_tile(hwp, bt, C, oc, itemsize, int(vmem_limit * 0.7))
        y, out_flat = _two_pass_call(x_flat, w1, w2, bt=bt, oc=oc, hw=hw,
                                     hwp=hwp, st=st, vmem_limit=vmem_limit)

    if hwp != hw:
        out_flat = out_flat[:, :, :hw]
    output = out_flat.reshape(B, oc, H, W)
    # TODO(synk): torch returns op_attention as 8 Python floats via .item();
    # here it is a length-8 device array (tiny wrapper-side reduction of y).
    op_attention = y.reshape(B, N_GROUPS, oc).sum(axis=(0, 2))
    return output, op_attention


# --------------------------------- reference ----------------------------------
def reference(x, w1, w2):
    B, C, H, W = x.shape
    oc = C // N_GROUPS
    pooled = jnp.mean(x, axis=(2, 3))
    h = jnp.maximum(pooled @ w1, 0.0)
    y = jax.nn.sigmoid(h @ w2)
    att = x * y[:, :, None, None]
    out = sum(att[:, i * oc:(i + 1) * oc] for i in range(N_GROUPS))
    op = jnp.stack([jnp.sum(y[:, i * oc:(i + 1) * oc]) for i in range(N_GROUPS)])
    return out, op


if __name__ == "__main__":
    key = jax.random.PRNGKey(0)

    def run_case(B, C, H, W, ratio, force_two_pass, k):
        hid = max(C // ratio, 1)
        kx, k1, k2 = jax.random.split(k, 3)
        x = jax.random.normal(kx, (B, C, H, W), dtype=jnp.float32)
        # Weights stored as [in, out] (pre-transposed vs torch Linear), bias=False.
        w1 = jax.random.normal(k1, (C, hid), dtype=jnp.float32) * 0.1
        w2 = jax.random.normal(k2, (hid, C), dtype=jnp.float32) * 0.1

        out, op = ops_attention(x, w1, w2, force_two_pass=force_two_pass)
        out = jax.block_until_ready(out)
        op = jax.block_until_ready(op)

        ref_out, ref_op = reference(x, w1, w2)
        assert out.shape == (B, C // N_GROUPS, H, W)
        assert op.shape == (N_GROUPS,)
        assert jnp.allclose(out, ref_out, atol=1e-4, rtol=1e-5)
        assert jnp.allclose(op, ref_op, atol=1e-4, rtol=1e-5)

    k0, k1 = jax.random.split(key)
    # Fused fast path: channel=32, ratio=16 -> hidden=2, H*W=256 (lane multiple,
    # 2 spatial chunks exercise the pl.loop pool + scale paths).
    run_case(2, 32, 16, 16, 16, False, k0)
    # Two-pass fallback + odd spatial size (H*W = 100 -> zero-padded to 128).
    run_case(3, 32, 10, 10, 16, True, k1)
    # Fused path with spatial padding as well.
    run_case(3, 32, 10, 10, 16, False, k1)

    print("KERNEL_OK")
</pallas_src>

<mosaic_0001>
module attributes {stable_mosaic.version = 11 : i64} {
  func.func @kernel(%arg0: i32, %arg1: memref<2x32x256xf32, #tpu.memory_space<vmem>>, %arg2: memref<32x2xf32, #tpu.memory_space<vmem>>, %arg3: memref<2x32xf32, #tpu.memory_space<vmem>>, %arg4: memref<2x32xf32, #tpu.memory_space<vmem>>, %arg5: memref<2x4x256xf32, #tpu.memory_space<vmem>>, %arg6: memref<2x32x128xf32, #tpu.memory_space<vmem>>) attributes {dimension_semantics = [#tpu.dimension_semantics<parallel>], iteration_bounds = array<i64: 1>, scalar_prefetch = 0 : i64, scratch_operands = 1 : i64, tpu.core_type = #tpu.core_type<tc>, window_params = [{transform_indices = @transform_0, window_bounds = array<i64: 2, 32, 256>}, {pipeline_mode = #tpu.pipeline_mode<synchronous>, transform_indices = @transform_1, window_bounds = array<i64: 32, 2>}, {pipeline_mode = #tpu.pipeline_mode<synchronous>, transform_indices = @transform_2, window_bounds = array<i64: 2, 32>}, {transform_indices = @transform_3, window_bounds = array<i64: 2, 32>}, {transform_indices = @transform_4, window_bounds = array<i64: 2, 4, 256>}]} {
    %cst = arith.constant 0.000000e+00 : f32
    %0 = vector.broadcast %cst : f32 to vector<2x32x128xf32>
    %c0 = arith.constant 0 : index
    %c0_0 = arith.constant 0 : index
    %c0_1 = arith.constant 0 : index
    %1 = vector.load %arg6[%c0, %c0_0, %c0_1] : memref<2x32x128xf32, #tpu.memory_space<vmem>>, vector<2x32x128xf32>
    tpu.vector_store %arg6[%c0, %c0_0, %c0_1], %0 {strides = array<i32>} : memref<2x32x128xf32, #tpu.memory_space<vmem>>, vector<2x32x128xf32>,
    %c0_i32 = arith.constant 0 : i32
    %c2_i32 = arith.constant 2 : i32
    %2 = arith.addi %c0_i32, %c2_i32 : i32
    %c1_i32 = arith.constant 1 : i32
    scf.for %arg7 = %c0_i32 to %2 step %c1_i32  : i32 {
      %c1_i32_22 = arith.constant 1 : i32
      %29 = arith.muli %arg7, %c1_i32_22 : i32
      %c0_i32_23 = arith.constant 0 : i32
      %30 = arith.addi %c0_i32_23, %29 : i32
      %c128_i32 = arith.constant 128 : i32
      %31 = arith.muli %30, %c128_i32 : i32
      %32 = tpu.assume_multiple %31, 128 : i32
      %c0_24 = arith.constant 0 : index
      %c0_25 = arith.constant 0 : index
      %c0_26 = arith.constant 0 : index
      %33 = vector.load %arg6[%c0_24, %c0_25, %c0_26] : memref<2x32x128xf32, #tpu.memory_space<vmem>>, vector<2x32x128xf32>
      %c0_27 = arith.constant 0 : index
      %c0_28 = arith.constant 0 : index
      %34 = arith.index_cast %32 : i32 to index
      %35 = vector.load %arg1[%c0_27, %c0_28, %34] : memref<2x32x256xf32, #tpu.memory_space<vmem>>, vector<2x32x128xf32>
      %36 = arith.addf %33, %35 : vector<2x32x128xf32>
      %c0_29 = arith.constant 0 : index
      %c0_30 = arith.constant 0 : index
      %c0_31 = arith.constant 0 : index
      %37 = vector.load %arg6[%c0_29, %c0_30, %c0_31] : memref<2x32x128xf32, #tpu.memory_space<vmem>>, vector<2x32x128xf32>
      tpu.vector_store %arg6[%c0_29, %c0_30, %c0_31], %36 {strides = array<i32>} : memref<2x32x128xf32, #tpu.memory_space<vmem>>, vector<2x32x128xf32>,
    }
    %c2_i32_2 = arith.constant 2 : i32
    %c0_3 = arith.constant 0 : index
    %c0_4 = arith.constant 0 : index
    %c0_5 = arith.constant 0 : index
    %3 = vector.load %arg6[%c0_3, %c0_4, %c0_5] : memref<2x32x128xf32, #tpu.memory_space<vmem>>, vector<2x32x128xf32>
    %cst_6 = arith.constant dense<0.000000e+00> : vector<2x32xf32>
    %4 = vector.multi_reduction <add>, %3, %cst_6 [2] : vector<2x32x128xf32> to vector<2x32xf32>
    %cst_7 = arith.constant 3.906250e-03 : f32
    %5 = vector.broadcast %cst_7 : f32 to vector<2x32xf32>
    %6 = arith.mulf %4, %5 : vector<2x32xf32>
    %c0_8 = arith.constant 0 : index
    %c0_9 = arith.constant 0 : index
    %7 = vector.load %arg2[%c0_8, %c0_9] : memref<32x2xf32, #tpu.memory_space<vmem>>, vector<32x2xf32>
    %cst_10 = arith.constant dense<0.000000e+00> : vector<2x2xf32>
    %8 = tpu.matmul %6, %7, %cst_10 {dimension_numbers = #tpu.dot_dimension_numbers<[1], [0], [0], [1], [0, 0, 1, 1], [], []>} : vector<2x32xf32>, vector<32x2xf32>, vector<2x2xf32> -> vector<2x2xf32>
    %cst_11 = arith.constant 0.000000e+00 : f32
    %9 = vector.broadcast %cst_11 : f32 to vector<2x2xf32>
    %10 = arith.maximumf %8, %9 : vector<2x2xf32>
    %c0_12 = arith.constant 0 : index
    %c0_13 = arith.constant 0 : index
    %11 = vector.load %arg3[%c0_12, %c0_13] : memref<2x32xf32, #tpu.memory_space<vmem>>, vector<2x32xf32>
    %cst_14 = arith.constant dense<0.000000e+00> : vector<2x32xf32>
    %12 = tpu.matmul %10, %11, %cst_14 {dimension_numbers = #tpu.dot_dimension_numbers<[1], [0], [0], [1], [0, 0, 1, 1], [], []>} : vector<2x2xf32>, vector<2x32xf32>, vector<2x32xf32> -> vector<2x32xf32>
    %13 = arith.negf %12 : vector<2x32xf32>
    %14 = math.exp %13 : vector<2x32xf32>
    %cst_15 = arith.constant 1.000000e+00 : f32
    %15 = vector.broadcast %cst_15 : f32 to vector<2x32xf32>
    %16 = arith.addf %15, %14 : vector<2x32xf32>
    %17 = arith.divf %15, %16 : vector<2x32xf32>
    %c0_16 = arith.constant 0 : index
    %c0_17 = arith.constant 0 : index
    %18 = vector.load %arg4[%c0_16, %c0_17] : memref<2x32xf32, #tpu.memory_space<vmem>>, vector<2x32xf32>
    tpu.vector_store %arg4[%c0_16, %c0_17], %17 {strides = array<i32>} : memref<2x32xf32, #tpu.memory_space<vmem>>, vector<2x32xf32>,
    %19 = vector.shape_cast %17 : vector<2x32xf32> to vector<2x32x1xf32>
    %20 = vector.extract_strided_slice %19 {offsets = [0, 0, 0], sizes = [2, 4, 1], strides = [1, 1, 1]} : vector<2x32x1xf32> to vector<2x4x1xf32>
    %21 = vector.extract_strided_slice %19 {offsets = [0, 4, 0], sizes = [2, 4, 1], strides = [1, 1, 1]} : vector<2x32x1xf32> to vector<2x4x1xf32>
    %22 = vector.extract_strided_slice %19 {offsets = [0, 8, 0], sizes = [2, 4, 1], strides = [1, 1, 1]} : vector<2x32x1xf32> to vector<2x4x1xf32>
    %23 = vector.extract_strided_slice %19 {offsets = [0, 12, 0], sizes = [2, 4, 1], strides = [1, 1, 1]} : vector<2x32x1xf32> to vector<2x4x1xf32>
    %24 = vector.extract_strided_slice %19 {offsets = [0, 16, 0], sizes = [2, 4, 1], strides = [1, 1, 1]} : vector<2x32x1xf32> to vector<2x4x1xf32>
    %25 = vector.extract_strided_slice %19 {offsets = [0, 20, 0], sizes = [2, 4, 1], strides = [1, 1, 1]} : vector<2x32x1xf32> to vector<2x4x1xf32>
    %26 = vector.extract_strided_slice %19 {offsets = [0, 24, 0], sizes = [2, 4, 1], strides = [1, 1, 1]} : vector<2x32x1xf32> to vector<2x4x1xf32>
    %27 = vector.extract_strided_slice %19 {offsets = [0, 28, 0], sizes = [2, 4, 1], strides = [1, 1, 1]} : vector<2x32x1xf32> to vector<2x4x1xf32>
    %c0_i32_18 = arith.constant 0 : i32
    %c2_i32_19 = arith.constant 2 : i32
    %28 = arith.addi %c0_i32_18, %c2_i32_19 : i32
    %c1_i32_20 = arith.constant 1 : i32
    scf.for %arg7 = %c0_i32_18 to %28 step %c1_i32_20  : i32 {
      %c1_i32_22 = arith.constant 1 : i32
      %29 = arith.muli %arg7, %c1_i32_22 : i32
      %c0_i32_23 = arith.constant 0 : i32
      %30 = arith.addi %c0_i32_23, %29 : i32
      %c128_i32 = arith.constant 128 : i32
      %31 = arith.muli %30, %c128_i32 : i32
      %32 = tpu.assume_multiple %31, 128 : i32
      %c0_24 = arith.constant 0 : index
      %c0_25 = arith.constant 0 : index
      %33 = arith.index_cast %32 : i32 to index
      %34 = vector.load %arg1[%c0_24, %c0_25, %33] : memref<2x32x256xf32, #tpu.memory_space<vmem>>, vector<2x4x128xf32>
      %35 = vector.broadcast %20 : vector<2x4x1xf32> to vector<2x4x128xf32>
      %36 = arith.mulf %34, %35 : vector<2x4x128xf32>
      %c0_26 = arith.constant 0 : index
      %c4 = arith.constant 4 : index
      %37 = arith.index_cast %32 : i32 to index
      %38 = vector.load %arg1[%c0_26, %c4, %37] : memref<2x32x256xf32, #tpu.memory_space<vmem>>, vector<2x4x128xf32>
      %39 = vector.broadcast %21 : vector<2x4x1xf32> to vector<2x4x128xf32>
      %40 = arith.mulf %38, %39 : vector<2x4x128xf32>
      %41 = arith.addf %36, %40 : vector<2x4x128xf32>
      %c0_27 = arith.constant 0 : index
      %c8 = arith.constant 8 : index
      %42 = arith.index_cast %32 : i32 to index
      %43 = vector.load %arg1[%c0_27, %c8, %42] : memref<2x32x256xf32, #tpu.memory_space<vmem>>, vector<2x4x128xf32>
      %44 = vector.broadcast %22 : vector<2x4x1xf32> to vector<2x4x128xf32>
      %45 = arith.mulf %43, %44 : vector<2x4x128xf32>
      %46 = arith.addf %41, %45 : vector<2x4x128xf32>
      %c0_28 = arith.constant 0 : index
      %c12 = arith.constant 12 : index
      %47 = arith.index_cast %32 : i32 to index
      %48 = vector.load %arg1[%c0_28, %c12, %47] : memref<2x32x256xf32, #tpu.memory_space<vmem>>, vector<2x4x128xf32>
      %49 = vector.broadcast %23 : vector<2x4x1xf32> to vector<2x4x128xf32>
      %50 = arith.mulf %48, %49 : vector<2x4x128xf32>
      %51 = arith.addf %46, %50 : vector<2x4x128xf32>
      %c0_29 = arith.constant 0 : index
      %c16 = arith.constant 16 : index
      %52 = arith.index_cast %32 : i32 to index
      %53 = vector.load %arg1[%c0_29, %c16, %52] : memref<2x32x256xf32, #tpu.memory_space<vmem>>, vector<2x4x128xf32>
      %54 = vector.broadcast %24 : vector<2x4x1xf32> to vector<2x4x128xf32>
      %55 = arith.mulf %53, %54 : vector<2x4x128xf32>
      %56 = arith.addf %51, %55 : vector<2x4x128xf32>
      %c0_30 = arith.constant 0 : index
      %c20 = arith.constant 20 : index
      %57 = arith.index_cast %32 : i32 to index
      %58 = vector.load %arg1[%c0_30, %c20, %57] : memref<2x32x256xf32, #tpu.memory_space<vmem>>, vector<2x4x128xf32>
      %59 = vector.broadcast %25 : vector<2x4x1xf32> to vector<2x4x128xf32>
      %60 = arith.mulf %58, %59 : vector<2x4x128xf32>
      %61 = arith.addf %56, %60 : vector<2x4x128xf32>
      %c0_31 = arith.constant 0 : index
      %c24 = arith.constant 24 : index
      %62 = arith.index_cast %32 : i32 to index
      %63 = vector.load %arg1[%c0_31, %c24, %62] : memref<2x32x256xf32, #tpu.memory_space<vmem>>, vector<2x4x128xf32>
      %64 = vector.broadcast %26 : vector<2x4x1xf32> to vector<2x4x128xf32>
      %65 = arith.mulf %63, %64 : vector<2x4x128xf32>
      %66 = arith.addf %61, %65 : vector<2x4x128xf32>
      %c0_32 = arith.constant 0 : index
      %c28 = arith.constant 28 : index
      %67 = arith.index_cast %32 : i32 to index
      %68 = vector.load %arg1[%c0_32, %c28, %67] : memref<2x32x256xf32, #tpu.memory_space<vmem>>, vector<2x4x128xf32>
      %69 = vector.broadcast %27 : vector<2x4x1xf32> to vector<2x4x128xf32>
      %70 = arith.mulf %68, %69 : vector<2x4x128xf32>
      %71 = arith.addf %66, %70 : vector<2x4x128xf32>
      %c0_33 = arith.constant 0 : index
      %c0_34 = arith.constant 0 : index
      %72 = arith.index_cast %32 : i32 to index
      %73 = vector.load %arg5[%c0_33, %c0_34, %72] : memref<2x4x256xf32, #tpu.memory_space<vmem>>, vector<2x4x128xf32>
      tpu.vector_store %arg5[%c0_33, %c0_34, %72], %71 {strides = array<i32>} : memref<2x4x256xf32, #tpu.memory_space<vmem>>, vector<2x4x128xf32>,
    }
    %c2_i32_21 = arith.constant 2 : i32
    return
  }
  func.func @transform_0(%arg0: i32) -> (i32, i32, i32) {
    %c0_i32 = arith.constant 0 : i32
    %c0_i32_0 = arith.constant 0 : i32
    %c0_i32_1 = arith.constant 0 : i32
    return %arg0, %c0_i32, %c0_i32_0 : i32, i32, i32
  }
  func.func @transform_1(%arg0: i32) -> (i32, i32) {
    %c0_i32 = arith.constant 0 : i32
    %c0_i32_0 = arith.constant 0 : i32
    %c0_i32_1 = arith.constant 0 : i32
    return %c0_i32, %c0_i32_0 : i32, i32
  }
  func.func @transform_2(%arg0: i32) -> (i32, i32) {
    %c0_i32 = arith.constant 0 : i32
    %c0_i32_0 = arith.constant 0 : i32
    %c0_i32_1 = arith.constant 0 : i32
    return %c0_i32, %c0_i32_0 : i32, i32
  }
  func.func @transform_3(%arg0: i32) -> (i32, i32) {
    %c0_i32 = arith.constant 0 : i32
    %c0_i32_0 = arith.constant 0 : i32
    return %arg0, %c0_i32 : i32, i32
  }
  func.func @transform_4(%arg0: i32) -> (i32, i32, i32) {
    %c0_i32 = arith.constant 0 : i32
    %c0_i32_0 = arith.constant 0 : i32
    %c0_i32_1 = arith.constant 0 : i32
    return %arg0, %c0_i32, %c0_i32_0 : i32, i32, i32
  }
}

</mosaic_0001>

<llo_original>
// kernel: tpu_custom_call.1
$region0: #{tpu_custom_call.1}
  #allocation0 [shape = 'u32[]', space=smem, size = 0x4, offset = 0x4, fixed_abs, tag = 'smem constant byte address 0x4 - core index']
  #allocation1 [shape = 'u32[144,128]{1,0:T(1,128)}', space=vmem, size = 0x12000, scoped, tag = 'internal scratch']
  #allocation2 [shape = 'f32[2,32,128]{2,1,0:T(8,128)}', space=vmem, size = 0x8000, scoped, tag = 'scratch operand']
  %s0 = inlined_call_operand.hbm [shape: f32[2,32,256], index: 0, kind: input, shape index: {}]
  %s1 = inlined_call_operand.vmem [shape: f32[32,2], index: 1, kind: input, shape index: {}]
  %s2 = inlined_call_operand.vmem [shape: f32[2,32], index: 2, kind: input, shape index: {}]
  %s3 = inlined_call_operand.hbm [shape: f32[2,32], index: 3, kind: output, shape index: {0}]
  %s4 = inlined_call_operand.hbm [shape: f32[2,4,256], index: 4, kind: output, shape index: {1}]
  %5 = xla_tuple %s3, %s4
  %s6 = sld [smem:[#allocation0]]
  $region48: #{tpu_custom_call.1} parent=0
    _
  %s8 = ssub.s32 1, %s6
  %s9 = scalar_select 0, %s8, %s6
  $region1: #{tpu_custom_call.1} parent=0
    #allocation3 [shape = 'u8[65536]{0}', space=vmem, size = 0x10000, scoped, tag = 'input window, operand 0, single buffered']
    #allocation4 [shape = 's32[1]{0}', space=sflag, size = 0x4, scoped, tag = 'scoped memory for tpu_custom_call.1']
    #allocation5 [shape = 's32[1]{0}', space=sflag, size = 0x4, scoped, tag = 'scoped memory for tpu_custom_call.1']
    #allocation6 [shape = 'u8[1024]{0}', space=vmem, size = 0x400, scoped, tag = 'output window, operand 0, single buffered']
    #allocation7 [shape = 'u8[8192]{0}', space=vmem, size = 0x2000, scoped, tag = 'output window, operand 1, single buffered']
    #allocation8 [shape = 's32[1]{0}', space=sflag, size = 0x4, scoped, tag = 'scoped memory for tpu_custom_call.1']
    %10 = vsyncpa [#allocation4], 0
    %11 = vsyncpa [#allocation5], 0
    %12 = vsyncpa [#allocation8], 0
    // Predicated region
    $region2: #{tpu_custom_call.1} parent=1 // pred_check
      _
    $region3: #{tpu_custom_call.1} parent=1 // pred_check_branch
      %14 = sbr.rel (0) target = $region5
    $region4: #{tpu_custom_call.1} parent=1 // pred_region
      %s16 = ssub.s32 2048, 2048
      %17 = vsyncadd [#allocation4], %s16
      %s18 = sshll.u32 [#allocation3], 4
      %s19 = int_to_ptr.vmem [resolvable:$true] %s18
      %24 = dma.hbm_to_vmem [thread:$0]  %s0, 2048, %s19, [#allocation4], 256, 256, 16
    $region5: #{tpu_custom_call.1} parent=1 // pred_fallthru
      _
    // Predicated region
    $region6: #{tpu_custom_call.1} parent=1 // pred_check
      _
    $region7: #{tpu_custom_call.1} parent=1 // pred_check_branch
      %26 = sbr.rel (0) target = $region9
    $region8: #{tpu_custom_call.1} parent=1 // pred_region
      _
    $region9: #{tpu_custom_call.1} parent=1 // pred_fallthru
      _
    // Predicated region
    $region10: #{tpu_custom_call.1} parent=1 // pred_check
      _
    $region11: #{tpu_custom_call.1} parent=1 // pred_check_branch
      %28 = sbr.rel (0) target = $region13
    $region12: #{tpu_custom_call.1} parent=1 // pred_region
      _
    $region13: #{tpu_custom_call.1} parent=1 // pred_fallthru
      _
    // Predicated region
    $region14: #{tpu_custom_call.1} parent=1 // pred_check
      _
    $region15: #{tpu_custom_call.1} parent=1 // pred_check_branch
      %30 = sbr.rel (0) target = $region17
    $region16: #{tpu_custom_call.1} parent=1 // pred_region
      %31 = dma.done [#allocation4], 2048
    $region17: #{tpu_custom_call.1} parent=1 // pred_fallthru
      _
    %32 = vst [vmem:[#allocation2] sm:$0xff] 0.0
    %33 = vst [vmem:[#allocation2 + $0x8] sm:$0xff] 0.0
    %34 = vst [vmem:[#allocation2 + $0x10] sm:$0xff] 0.0
    %35 = vst [vmem:[#allocation2 + $0x18] sm:$0xff] 0.0
    %36 = vst [vmem:[#allocation2 + $0x20] sm:$0xff] 0.0
    %37 = vst [vmem:[#allocation2 + $0x28] sm:$0xff] 0.0
    %38 = vst [vmem:[#allocation2 + $0x30] sm:$0xff] 0.0
    %39 = vst [vmem:[#allocation2 + $0x38] sm:$0xff] 0.0
    loop: start=0, step=1, limit=2
    $region18: #{tpu_custom_call.1} parent=1 // loop_pre_header
      _
    $region19: #{tpu_custom_call.1} parent=1 // loop_header
      %s41 = sphi 0, %s45
      %p42 = scmp.ge.s32.totalorder %s41, 2
    $region20: #{tpu_custom_call.1} parent=1 // loop_header_branch
      %44 = sbr.rel (%p42) target = $region24
    $region21: #{tpu_custom_call.1} parent=1 // loop_body
      %s46 = smul.u32 %s41, 128
      %v47 = vld [vmem:[#allocation2] sm:$0xff]
      %v48 = vld [vmem:[#allocation2 + $0x8] sm:$0xff]
      %v49 = vld [vmem:[#allocation2 + $0x10] sm:$0xff]
      %v50 = vld [vmem:[#allocation2 + $0x18] sm:$0xff]
      %v51 = vld [vmem:[#allocation2 + $0x20] sm:$0xff]
      %v52 = vld [vmem:[#allocation2 + $0x28] sm:$0xff]
      %v53 = vld [vmem:[#allocation2 + $0x30] sm:$0xff]
      %v54 = vld [vmem:[#allocation2 + $0x38] sm:$0xff]
      %s55 = sshra.s32 %s46, 7
      %s56 = sand.u32 %s46, 127
      %s57 = smul.addr %s55, 8
      %s58 = scalar_lea.vmem [#allocation3], %s57
      %v59 = vld [vmem:[%s58] sm:$0xff]
      %v60 = vld [vmem:[%s58 + $0x10] sm:$0xff]
      %v61 = vld [vmem:[%s58 + $0x20] sm:$0xff]
      %v62 = vld [vmem:[%s58 + $0x30] sm:$0xff]
      %v63 = vld [vmem:[%s58 + $0x40] sm:$0xff]
      %v64 = vld [vmem:[%s58 + $0x50] sm:$0xff]
      %v65 = vld [vmem:[%s58 + $0x60] sm:$0xff]
      %v66 = vld [vmem:[%s58 + $0x70] sm:$0xff]
      %v67 = vadd.f32 %v47, %v59
      %v68 = vadd.f32 %v48, %v60
      %v69 = vadd.f32 %v49, %v61
      %v70 = vadd.f32 %v50, %v62
      %v71 = vadd.f32 %v51, %v63
      %v72 = vadd.f32 %v52, %v64
      %v73 = vadd.f32 %v53, %v65
      %v74 = vadd.f32 %v54, %v66
      %75 = vst [vmem:[#allocation2] sm:$0xff] %v67
      %76 = vst [vmem:[#allocation2 + $0x8] sm:$0xff] %v68
      %77 = vst [vmem:[#allocation2 + $0x10] sm:$0xff] %v69
      %78 = vst [vmem:[#allocation2 + $0x18] sm:$0xff] %v70
      %79 = vst [vmem:[#allocation2 + $0x20] sm:$0xff] %v71
      %80 = vst [vmem:[#allocation2 + $0x28] sm:$0xff] %v72
      %81 = vst [vmem:[#allocation2 + $0x30] sm:$0xff] %v73
      %82 = vst [vmem:[#allocation2 + $0x38] sm:$0xff] %v74
    $region22: #{tpu_custom_call.1} parent=1 // loop_footer
      %s45 = sadd.s32 1, %s41
    $region23: #{tpu_custom_call.1} parent=1 // loop_footer_branch
      %40 = sbr.rel target = $region19
    $region24: #{tpu_custom_call.1} parent=1 // loop_exit
      _
    %v83 = vld [vmem:[#allocation2] sm:$0xff]
    %v84 = vld [vmem:[#allocation2 + $0x8] sm:$0xff]
    %v85 = vld [vmem:[#allocation2 + $0x10] sm:$0xff]
    %v86 = vld [vmem:[#allocation2 + $0x18] sm:$0xff]
    %v87 = vld [vmem:[#allocation2 + $0x20] sm:$0xff]
    %v88 = vld [vmem:[#allocation2 + $0x28] sm:$0xff]
    %v89 = vld [vmem:[#allocation2 + $0x30] sm:$0xff]
    %v90 = vld [vmem:[#allocation2 + $0x38] sm:$0xff]
    %91 = vadd.xlane.f32.xlu0 %v83
    %v92 = vpop.xlane.xlu0 %91
    %93 = vadd.xlane.f32.xlu0 %v84
    %v94 = vpop.xlane.xlu0 %93
    %95 = vadd.xlane.f32.xlu0 %v85
    %v96 = vpop.xlane.xlu0 %95
    %97 = vadd.xlane.f32.xlu0 %v86
    %v98 = vpop.xlane.xlu0 %97
    %99 = vadd.xlane.f32.xlu0 %v87
    %v100 = vpop.xlane.xlu0 %99
    %101 = vadd.xlane.f32.xlu0 %v88
    %v102 = vpop.xlane.xlu0 %101
    %103 = vadd.xlane.f32.xlu0 %v89
    %v104 = vpop.xlane.xlu0 %103
    %105 = vadd.xlane.f32.xlu0 %v90
    %v106 = vpop.xlane.xlu0 %105
    %v107 = vmul.f32 %v92, 0.00390625
    %v108 = vmul.f32 %v94, 0.00390625
    %v109 = vmul.f32 %v96, 0.00390625
    %v110 = vmul.f32 %v98, 0.00390625
    %v111 = vmul.f32 %v100, 0.00390625
    %v112 = vmul.f32 %v102, 0.00390625
    %v113 = vmul.f32 %v104, 0.00390625
    %v114 = vmul.f32 %v106, 0.00390625
    %v115 = vld [vmem:[%s1] sm:$0xff]
    %v116 = vld [vmem:[%s1 + $0x8] sm:$0xff]
    %v117 = vld [vmem:[%s1 + $0x10] sm:$0xff]
    %v118 = vld [vmem:[%s1 + $0x18] sm:$0xff]
    %v127 = vlaneseq
    %v128 = vand.u32 %v127, 127
    %v129 = vlaneseq
    %v130 = vshrl.u32 %v129, 7
    %v131 = vsub.s32 %v128, %v130
    %v132 = vrot.slane %v107, %v131
    %v133 = vadd.s32 %v128, 4294967288
    %v134 = vlaneseq
    %v135 = vshrl.u32 %v134, 7
    %v136 = vsub.s32 %v133, %v135
    %v137 = vrot.slane %v108, %v136
    %vm138 = vcmask 130112
    %v139 = vsel %vm138, %v137, %v132
    %v140 = vadd.s32 %v128, 4294967280
    %v141 = vlaneseq
    %v142 = vshrl.u32 %v141, 7
    %v143 = vsub.s32 %v140, %v142
    %v144 = vrot.slane %v109, %v143
    %vm145 = vcmask 195712
    %v146 = vsel %vm145, %v144, %v139
    %v147 = vadd.s32 %v128, 4294967272
    %v148 = vlaneseq
    %v149 = vshrl.u32 %v148, 7
    %v150 = vsub.s32 %v147, %v149
    %v151 = vrot.slane %v110, %v150
    %vm152 = vcmask 261312
    %v153 = vsel %vm152, %v151, %v146
    %v154 = vlaneseq
    %v155 = vshrl.u32 %v154, 7
    %v156 = vsub.s32 %v128, %v155
    %v157 = vrot.slane %v111, %v156
    %v158 = vlaneseq
    %v159 = vshrl.u32 %v158, 7
    %v160 = vsub.s32 %v133, %v159
    %v161 = vrot.slane %v112, %v160
    %v162 = vsel %vm138, %v161, %v157
    %v163 = vlaneseq
    %v164 = vshrl.u32 %v163, 7
    %v165 = vsub.s32 %v140, %v164
    %v166 = vrot.slane %v113, %v165
    %v167 = vsel %vm145, %v166, %v162
    %v168 = vlaneseq
    %v169 = vshrl.u32 %v168, 7
    %v170 = vsub.s32 %v147, %v169
    %v171 = vrot.slane %v114, %v170
    %v172 = vsel %vm152, %v171, %v167
    %vm173 = vcmask 1041409
    %v174 = vsel %vm173, %v172, %v153
    %vm175 = vcmask 261120
    %v176 = vsel %vm175, %v174, 0
    %178 = vmatprep.subr.mxu0 0.0
    %179 = vmatpush1.msra.mxu0 %v115
    %180 = vmatprep.subr.mxu0 0.0
    %181 = vmatpush1.msra.mxu0 %v116
    %182 = vmatprep.subr.mxu0 0.0
    %183 = vmatpush1.msra.mxu0 %v117
    %184 = vmatprep.subr.mxu0 0.0
    %185 = vmatpush1.msra.mxu0 %v118
    %186 = vmatprep.subr.mxu0 0.0
    %187 = vmatpush1.msra.mxu0 0.0
    %188 = vmatprep.subr.mxu0 0.0
    %189 = vmatpush1.msra.mxu0 0.0
    %190 = vmatprep.subr.mxu0 0.0
    %191 = vmatpush1.msra.mxu0 0.0
    %192 = vmatprep.subr.mxu0 0.0
    %193 = vmatpush1.msra.mxu0 0.0
    %194 = vmatprep.subr.mxu0 0.0
    %195 = vmatpush1.msra.mxu0 0.0
    %196 = vmatprep.subr.mxu0 0.0
    %197 = vmatpush1.msra.mxu0 0.0
    %198 = vmatprep.subr.mxu0 0.0
    %199 = vmatpush1.msra.mxu0 0.0
    %200 = vmatprep.subr.mxu0 0.0
    %201 = vmatpush1.msra.mxu0 0.0
    %202 = vmatprep.subr.mxu0 0.0
    %203 = vmatpush1.msra.mxu0 0.0
    %204 = vmatprep.subr.mxu0 0.0
    %205 = vmatpush1.msra.mxu0 0.0
    %206 = vmatprep.subr.mxu0 0.0
    %207 = vmatpush1.msra.mxu0 0.0
    %208 = vmatprep.subr.mxu0 0.0
    %209 = vmatpush1.msra.mxu0 0.0
    %210 = vmatprep.subr.mxu0 0.0
    %211 = vmatpush1.msra.mxu0 0.0
    %212 = vmatprep.subr.mxu0 0.0
    %213 = vmatpush1.msra.mxu0 0.0
    %214 = vmatprep.subr.mxu0 0.0
    %215 = vmatpush1.msra.mxu0 0.0
    %216 = vmatprep.subr.mxu0 0.0
    %217 = vmatpush1.msra.mxu0 0.0
    %218 = vmatprep.subr.mxu0 0.0
    %219 = vmatpush1.msra.mxu0 0.0
    %220 = vmatprep.subr.mxu0 0.0
    %221 = vmatpush1.msra.mxu0 0.0
    %222 = vmatprep.subr.mxu0 0.0
    %223 = vmatpush1.msra.mxu0 0.0
    %224 = vmatprep.subr.mxu0 0.0
    %225 = vmatpush1.msra.mxu0 0.0
    %226 = vmatprep.subr.mxu0 0.0
    %227 = vmatpush1.msra.mxu0 0.0
    %228 = vmatprep.subr.mxu0 0.0
    %229 = vmatpush1.msra.mxu0 0.0
    %230 = vmatprep.subr.mxu0 0.0
    %231 = vmatpush1.msra.mxu0 0.0
    %232 = vmatprep.subr.mxu0 0.0
    %233 = vmatpush1.msra.mxu0 0.0
    %234 = vmatprep.subr.mxu0 0.0
    %235 = vmatpush1.msra.mxu0 0.0
    %236 = vmatprep.subr.mxu0 0.0
    %237 = vmatpush1.msra.mxu0 0.0
    %238 = vmatprep.subr.mxu0 0.0
    %239 = vmatpush1.msra.mxu0 0.0
    %240 = vmatprep.subr.mxu0 0.0
    %241 = vmatpush1.msra.mxu0 0.0
    %242 = vmatprep.mubr.f32.mxu0 0.0
    %243 = vmatmul.mubr.f32.gmra.mrb[0].mxu0 %v176
    %v244 = vpop.f32.mrb[0].mxu0
    %v245 = vadd.f32 0.0, %v244
    %v246 = vpop.f32.mrb[0].mxu0
    %247 = vdwg.mxu0
    %v248 = vmax.f32 %v245, 0.0
    %v249 = vld [vmem:[%s2] sm:$0x3]
    %vm250 = vcmask 15360
    %v252 = vsel %vm250, %v248, 0
    %vm254 = vcmask 1041408
    %v256 = vsel %vm254, %v249, 0
    %258 = vmatprep.subr.mxu0 0.0
    %259 = vmatpush1.msra.mxu0 %v256
    %260 = vmatprep.subr.mxu0 0.0
    %261 = vmatpush1.msra.mxu0 0.0
    %262 = vmatprep.subr.mxu0 0.0
    %263 = vmatpush1.msra.mxu0 0.0
    %264 = vmatprep.subr.mxu0 0.0
    %265 = vmatpush1.msra.mxu0 0.0
    %266 = vmatprep.subr.mxu0 0.0
    %267 = vmatpush1.msra.mxu0 0.0
    %268 = vmatprep.subr.mxu0 0.0
    %269 = vmatpush1.msra.mxu0 0.0
    %270 = vmatprep.subr.mxu0 0.0
    %271 = vmatpush1.msra.mxu0 0.0
    %272 = vmatprep.subr.mxu0 0.0
    %273 = vmatpush1.msra.mxu0 0.0
    %274 = vmatprep.subr.mxu0 0.0
    %275 = vmatpush1.msra.mxu0 0.0
    %276 = vmatprep.subr.mxu0 0.0
    %277 = vmatpush1.msra.mxu0 0.0
    %278 = vmatprep.subr.mxu0 0.0
    %279 = vmatpush1.msra.mxu0 0.0
    %280 = vmatprep.subr.mxu0 0.0
    %281 = vmatpush1.msra.mxu0 0.0
    %282 = vmatprep.subr.mxu0 0.0
    %283 = vmatpush1.msra.mxu0 0.0
    %284 = vmatprep.subr.mxu0 0.0
    %285 = vmatpush1.msra.mxu0 0.0
    %286 = vmatprep.subr.mxu0 0.0
    %287 = vmatpush1.msra.mxu0 0.0
    %288 = vmatprep.subr.mxu0 0.0
    %289 = vmatpush1.msra.mxu0 0.0
    %290 = vmatprep.subr.mxu0 0.0
    %291 = vmatpush1.msra.mxu0 0.0
    %292 = vmatprep.subr.mxu0 0.0
    %293 = vmatpush1.msra.mxu0 0.0
    %294 = vmatprep.subr.mxu0 0.0
    %295 = vmatpush1.msra.mxu0 0.0
    %296 = vmatprep.subr.mxu0 0.0
    %297 = vmatpush1.msra.mxu0 0.0
    %298 = vmatprep.subr.mxu0 0.0
    %299 = vmatpush1.msra.mxu0 0.0
    %300 = vmatprep.subr.mxu0 0.0
    %301 = vmatpush1.msra.mxu0 0.0
    %302 = vmatprep.subr.mxu0 0.0
    %303 = vmatpush1.msra.mxu0 0.0
    %304 = vmatprep.subr.mxu0 0.0
    %305 = vmatpush1.msra.mxu0 0.0
    %306 = vmatprep.subr.mxu0 0.0
    %307 = vmatpush1.msra.mxu0 0.0
    %308 = vmatprep.subr.mxu0 0.0
    %309 = vmatpush1.msra.mxu0 0.0
    %310 = vmatprep.subr.mxu0 0.0
    %311 = vmatpush1.msra.mxu0 0.0
    %312 = vmatprep.subr.mxu0 0.0
    %313 = vmatpush1.msra.mxu0 0.0
    %314 = vmatprep.subr.mxu0 0.0
    %315 = vmatpush1.msra.mxu0 0.0
    %316 = vmatprep.subr.mxu0 0.0
    %317 = vmatpush1.msra.mxu0 0.0
    %318 = vmatprep.subr.mxu0 0.0
    %319 = vmatpush1.msra.mxu0 0.0
    %320 = vmatprep.subr.mxu0 0.0
    %321 = vmatpush1.msra.mxu0 0.0
    %322 = vmatprep.mubr.f32.mxu0 0.0
    %323 = vmatmul.mubr.f32.gmra.mrb[0].mxu0 %v252
    %v324 = vpop.f32.mrb[0].mxu0
    %v325 = vadd.f32 0.0, %v324
    %v326 = vpop.f32.mrb[0].mxu0
    %327 = vdwg.mxu0
    %v328 = vxor.u32 %v325, 2147483648
    %v329 = vmul.f32 %v328, 1.442695
    %v330 = vpow.pop %v329
    %v331 = vadd.f32 %v330, 1.0
    %v332 = vrcp.pop %v331
    %v333 = vmul.f32 1.0, %v332
    %vm334 = vcmask 254976
    %335 = vst.msk [vmem:[#allocation6] sm:$0x3] %vm334, %v333
    %v336 = vlaneseq
    %v337 = vshrl.u32 %v336, 7
    %v338 = vsub.s32 0, %v337
    %v339 = vrot.slane %v333, %v338
    %341 = vbcast.lane.b32.xlu0 %v339, 256
    %v342 = vpop.permute.xlu0 %341
    %s344 = sor.u32 256, 8
    %345 = vbcast.lane.b32.xlu0 %v339, %s344
    %v346 = vpop.permute.xlu0 %345
    %s348 = sor.u32 256, 16
    %349 = vbcast.lane.b32.xlu0 %v339, %s348
    %v350 = vpop.permute.xlu0 %349
    %s352 = sor.u32 256, 24
    %353 = vbcast.lane.b32.xlu0 %v339, %s352
    %v354 = vpop.permute.xlu0 %353
    %v355 = vlaneseq
    %v356 = vshrl.u32 %v355, 7
    %v357 = vsub.s32 1, %v356
    %v358 = vrot.slane %v333, %v357
    %360 = vbcast.lane.b32.xlu0 %v358, 256
    %v361 = vpop.permute.xlu0 %360
    %s363 = sor.u32 256, 8
    %364 = vbcast.lane.b32.xlu0 %v358, %s363
    %v365 = vpop.permute.xlu0 %364
    %s367 = sor.u32 256, 16
    %368 = vbcast.lane.b32.xlu0 %v358, %s367
    %v369 = vpop.permute.xlu0 %368
    %s371 = sor.u32 256, 24
    %372 = vbcast.lane.b32.xlu0 %v358, %s371
    %v373 = vpop.permute.xlu0 %372
    loop: start=0, step=1, limit=2
    $region25: #{tpu_custom_call.1} parent=1 // loop_pre_header
      _
    $region26: #{tpu_custom_call.1} parent=1 // loop_header
      %s375 = sphi 0, %s379
      %p376 = scmp.ge.s32.totalorder %s375, 2
    $region27: #{tpu_custom_call.1} parent=1 // loop_header_branch
      %378 = sbr.rel (%p376) target = $region31
    $region28: #{tpu_custom_call.1} parent=1 // loop_body
      %s380 = smul.u32 %s375, 128
      %s381 = sshra.s32 %s380, 7
      %s382 = sand.u32 %s380, 127
      %s383 = smul.addr %s381, 8
      %s384 = scalar_lea.vmem [#allocation3], %s383
      %v385 = vld [vmem:[%s384] sm:$0xf]
      %v386 = vld [vmem:[%s384 + $0x40] sm:$0xf]
      %v387 = vmul.f32 %v385, %v342
      %v388 = vmul.f32 %v386, %v361
      %v389 = vld [vmem:[%s384] sm:$0xf0]
      %v390 = vld [vmem:[%s384 + $0x40] sm:$0xf0]
      %v391 = vmul.f32 %v389, %v342
      %v392 = vmul.f32 %v390, %v361
      %v395 = vrot.slane %v391, 4
      %v396 = vrot.slane %v392, 4
      %v399 = vadd.f32 %v387, %v395
      %v400 = vadd.f32 %v388, %v396
      %v401 = vld [vmem:[%s384 + $0x10] sm:$0xf]
      %v402 = vld [vmem:[%s384 + $0x50] sm:$0xf]
      %v403 = vmul.f32 %v401, %v346
      %v404 = vmul.f32 %v402, %v365
      %v405 = vadd.f32 %v399, %v403
      %v406 = vadd.f32 %v400, %v404
      %v407 = vld [vmem:[%s384 + $0x10] sm:$0xf0]
      %v408 = vld [vmem:[%s384 + $0x50] sm:$0xf0]
      %v409 = vmul.f32 %v407, %v346
      %v410 = vmul.f32 %v408, %v365
      %v413 = vrot.slane %v409, 4
      %v414 = vrot.slane %v410, 4
      %v417 = vadd.f32 %v405, %v413
      %v418 = vadd.f32 %v406, %v414
      %v419 = vld [vmem:[%s384 + $0x20] sm:$0xf]
      %v420 = vld [vmem:[%s384 + $0x60] sm:$0xf]
      %v421 = vmul.f32 %v419, %v350
      %v422 = vmul.f32 %v420, %v369
      %v423 = vadd.f32 %v417, %v421
      %v424 = vadd.f32 %v418, %v422
      %v425 = vld [vmem:[%s384 + $0x20] sm:$0xf0]
      %v426 = vld [vmem:[%s384 + $0x60] sm:$0xf0]
      %v427 = vmul.f32 %v425, %v350
      %v428 = vmul.f32 %v426, %v369
      %v431 = vrot.slane %v427, 4
      %v432 = vrot.slane %v428, 4
      %v435 = vadd.f32 %v423, %v431
      %v436 = vadd.f32 %v424, %v432
      %v437 = vld [vmem:[%s384 + $0x30] sm:$0xf]
      %v438 = vld [vmem:[%s384 + $0x70] sm:$0xf]
      %v439 = vmul.f32 %v437, %v354
      %v440 = vmul.f32 %v438, %v373
      %v441 = vadd.f32 %v435, %v439
      %v442 = vadd.f32 %v436, %v440
      %v443 = vld [vmem:[%s384 + $0x30] sm:$0xf0]
      %v444 = vld [vmem:[%s384 + $0x70] sm:$0xf0]
      %v445 = vmul.f32 %v443, %v354
      %v446 = vmul.f32 %v444, %v373
      %v449 = vrot.slane %v445, 4
      %v450 = vrot.slane %v446, 4
      %v453 = vadd.f32 %v441, %v449
      %v454 = vadd.f32 %v442, %v450
      %s455 = smul.addr %s381, 4
      %s456 = scalar_lea.vmem [#allocation7], %s455
      %457 = vst [vmem:[%s456] sm:$0xf] %v453
      %458 = vst [vmem:[%s456 + $0x8] sm:$0xf] %v454
    $region29: #{tpu_custom_call.1} parent=1 // loop_footer
      %s379 = sadd.s32 1, %s375
    $region30: #{tpu_custom_call.1} parent=1 // loop_footer_branch
      %374 = sbr.rel target = $region26
    $region31: #{tpu_custom_call.1} parent=1 // loop_exit
      _
    // Predicated region
    $region32: #{tpu_custom_call.1} parent=1 // pred_check
      _
    $region33: #{tpu_custom_call.1} parent=1 // pred_check_branch
      %460 = sbr.rel (0) target = $region35
    $region34: #{tpu_custom_call.1} parent=1 // pred_region
      %s462 = ssub.s32 32, 32
      %463 = vsyncadd [#allocation5], %s462
      %s465 = sshll.u32 [#allocation6], 4
      %s466 = int_to_ptr.vmem [resolvable:$true] %s465
      %468 = dma.vmem_to_hbm [thread:$0]  %s466, 32, %s3, [#allocation5]
    $region35: #{tpu_custom_call.1} parent=1 // pred_fallthru
      _
    // Predicated region
    $region36: #{tpu_custom_call.1} parent=1 // pred_check
      _
    $region37: #{tpu_custom_call.1} parent=1 // pred_check_branch
      %470 = sbr.rel (0) target = $region39
    $region38: #{tpu_custom_call.1} parent=1 // pred_region
      %s472 = ssub.s32 256, 256
      %473 = vsyncadd [#allocation8], %s472
      %s474 = sshll.u32 [#allocation7], 4
      %s475 = int_to_ptr.vmem [resolvable:$true] %s474
      %480 = dma.vmem_to_hbm [thread:$0]  %s475, 256, %s4, [#allocation8], 128, 128, 8
    $region39: #{tpu_custom_call.1} parent=1 // pred_fallthru
      _
    // Predicated region
    $region40: #{tpu_custom_call.1} parent=1 // pred_check
      _
    $region41: #{tpu_custom_call.1} parent=1 // pred_check_branch
      %482 = sbr.rel (0) target = $region43
    $region42: #{tpu_custom_call.1} parent=1 // pred_region
      %483 = dma.done [#allocation5], 32
    $region43: #{tpu_custom_call.1} parent=1 // pred_fallthru
      _
    // Predicated region
    $region44: #{tpu_custom_call.1} parent=1 // pred_check
      _
    $region45: #{tpu_custom_call.1} parent=1 // pred_check_branch
      %485 = sbr.rel (0) target = $region47
    $region46: #{tpu_custom_call.1} parent=1 // pred_region
      %486 = dma.done [#allocation8], 256
    $region47: #{tpu_custom_call.1} parent=1 // pred_fallthru
      _
    %487 = vsyncpa [#allocation4], 1
    %488 = vsyncpa [#allocation5], 1
    %489 = vsyncpa [#allocation8], 1

</llo_original>
